<compile_context>
chip_gen: v5e
topology: v5e:2x2
jax: 0.10.0
libtpu: 0.0.40
codegen_flags: <defaults>
</compile_context>

<pallas_src>
import functools

import jax
import jax.numpy as jnp
from jax import lax
from jax.experimental import pallas as pl
from jax.experimental.pallas import tpu as pltpu


def _round_up(x, m):
    return (x + m - 1) // m * m


def _cdiv(a, b):
    return -(-a // b)


# ----------------------------------------------------------------------------
# Kernels
# ----------------------------------------------------------------------------
def _ce_from_d(d, tgt):
    """CE per row from d = logits - rowmax: log(sum exp d) - d[target]."""
    log_z = jnp.log(jnp.sum(jnp.exp(d), axis=1, keepdims=True))
    iota = lax.broadcasted_iota(jnp.int32, d.shape, 1)
    tgt_d = jnp.sum(jnp.where(iota == tgt, d, 0.0), axis=1, keepdims=True)
    return log_z - tgt_d  # (tn, 1)


def _kd_rows(s_shift, log_zq, teacher, inv_temp):
    """sum_c p_c (log p_c - log q_c) per row, p from teacher, q from student."""
    mt = jnp.max(teacher, axis=1, keepdims=True)
    t_shift = teacher - mt
    if inv_temp != 1.0:
        t_shift = t_shift * inv_temp
    et = jnp.exp(t_shift)                            # un-normalized p (>= 0)
    zt = jnp.sum(et, axis=1, keepdims=True)          # (tn, 1)
    # where-guard reproduces F.kl_div's zero-contribution convention for
    # p == 0 (e.g. -inf masked teacher logits) without a 0 * inf NaN path.
    inner = jnp.sum(jnp.where(et > 0.0, et * (t_shift - s_shift), 0.0),
                    axis=1, keepdims=True)
    return inner * pl.reciprocal(zt) + (log_zq - jnp.log(zt))  # (tn, 1)


def _ce_kernel(logits_ref, tgt_ref, out_ref):
    x = logits_ref[...].astype(jnp.float32)
    m = jnp.max(x, axis=1, keepdims=True)
    out_ref[...] = _ce_from_d(x - m, tgt_ref[...])


def _kd_only_kernel(logits_ref, teacher_ref, out_ref, *, inv_temp, temp_sq):
    x = logits_ref[...].astype(jnp.float32)
    teacher = teacher_ref[...].astype(jnp.float32)
    m = jnp.max(x, axis=1, keepdims=True)
    s_shift = x - m
    if inv_temp != 1.0:
        s_shift = s_shift * inv_temp
    log_zq = jnp.log(jnp.sum(jnp.exp(s_shift), axis=1, keepdims=True))
    kd = _kd_rows(s_shift, log_zq, teacher, inv_temp)
    out_ref[...] = kd * temp_sq


def _kd_blend_kernel(logits_ref, teacher_ref, tgt_ref, out_ref, *,
                     kd_term, inv_temp, temp_sq):
    x = logits_ref[...].astype(jnp.float32)          # (tn, C)
    teacher = teacher_ref[...].astype(jnp.float32)   # (tn, C)
    tgt = tgt_ref[...]                               # (tn, 1) int32

    # One shared student row max: since 1/T > 0, max(x/T) == max(x)/T, and
    # d = x - m is reused by the CE gather, the CE exp and the scaled softmax.
    m = jnp.max(x, axis=1, keepdims=True)
    d = x - m

    iota = lax.broadcasted_iota(jnp.int32, d.shape, 1)
    tgt_d = jnp.sum(jnp.where(iota == tgt, d, 0.0), axis=1, keepdims=True)

    if inv_temp == 1.0:
        # T == 1: exp(d) serves both the CE partition function and zq.
        log_z = jnp.log(jnp.sum(jnp.exp(d), axis=1, keepdims=True))
        ce = log_z - tgt_d
        s_shift, log_zq = d, log_z
    else:
        ce = jnp.log(jnp.sum(jnp.exp(d), axis=1, keepdims=True)) - tgt_d
        s_shift = d * inv_temp
        log_zq = jnp.log(jnp.sum(jnp.exp(s_shift), axis=1, keepdims=True))

    kd = _kd_rows(s_shift, log_zq, teacher, inv_temp)
    out_ref[...] = kd * (kd_term * temp_sq) + ce * (1.0 - kd_term)


# ----------------------------------------------------------------------------
# Tile / VMEM heuristics
# ----------------------------------------------------------------------------
def _vmem_limit_bytes():
    """Generation-aware VMEM limit: ~3/4 of capacity, capped at 96 MiB."""
    cap = 64 * 1024 * 1024  # conservative default (v7x per-TC VMEM)
    try:
        info = pltpu.get_tpu_info()
        c = getattr(info, "vmem_capacity_bytes", None)
        if c:
            cap = int(c)
    except Exception:
        pass
    # Never request the whole physical VMEM: leave headroom for compiler
    # internal scratch and the double-buffered DMA windows.
    return max(32 * 1024 * 1024, min((cap * 3) // 4, 96 * 1024 * 1024))


def _pick_tile_n(n, c, in_itemsizes, budget_bytes, mult):
    """Largest row tile that keeps all per-step buffers within budget."""
    n_inputs = len(in_itemsizes)
    # Per-row VMEM footprint:
    #   * double-buffered input blocks at their HBM dtype
    #   * estimated live full-width f32 temporaries inside the kernel
    #   * narrow (tile_n, 1) target/output blocks are lane-padded to 128
    #     (512 B/row/buffer) in VMEM even though HBM traffic is 4 B/row.
    in_row = 2 * c * sum(in_itemsizes)
    temps_row = 4 * c * (6 if n_inputs > 1 else 4)
    narrow_row = 2 * 2 * 128 * 4
    per_row = in_row + temps_row + narrow_row

    t = int(budget_bytes // per_row)
    t = (t // mult) * mult
    n_pad = _round_up(n, mult)
    # Keep the grid at >= 2 (usually >= 4) balanced steps so the "parallel"
    # batch axis shards across v7x's two TensorCores and the DMA pipeline has
    # steps to overlap.
    if n_pad >= 4 * mult:
        t = min(t, _round_up(_cdiv(n, 4), mult))
    elif n_pad >= 2 * mult:
        t = min(t, _round_up(_cdiv(n, 2), mult))
    t = min(t, n_pad)
    return max(mult, t)


# ----------------------------------------------------------------------------
# Wrapper
# ----------------------------------------------------------------------------
def kd_loss(output_logits, targets, teacher_logits=None, *,
            kd_term=0.0, temp=1.0, tile_n=None):
    """JAX/Pallas equivalent of KDLoss.forward (reduction='none').

    Logits may be float32 or bfloat16 (bf16 halves HBM traffic; math is f32
    inside the kernel). Returns a float32 per-sample loss of shape (N,).
    """
    kd_term = float(kd_term)
    temp = float(temp)
    assert 0.0 <= kd_term <= 1.0
    assert temp > 0.0
    n, c = output_logits.shape
    inv_temp = 1.0 / temp

    has_teacher = (teacher_logits is not None) and (kd_term > 0.0)
    use_ce = kd_term < 1.0

    in_arrays = [output_logits]
    if has_teacher:
        in_arrays.append(teacher_logits)
    in_itemsizes = [jnp.dtype(a.dtype).itemsize for a in in_arrays]
    # bf16 packs 2 rows per sublane (int8/fp8: 4) -> keep tiles pack-aligned.
    mult = max(8, 32 // min(in_itemsizes))

    vmem_limit = _vmem_limit_bytes()
    if tile_n is None:
        tile_n = _pick_tile_n(n, c, in_itemsizes, (vmem_limit * 4) // 5, mult)
    tile_n = max(mult, _round_up(int(tile_n), mult))
    tile_n = min(tile_n, _round_up(n, mult))

    grid = (_cdiv(n, tile_n),)

    row_spec = pl.BlockSpec((tile_n, c), lambda i: (i, 0))
    col_spec = pl.BlockSpec((tile_n, 1), lambda i: (i, 0))
    out_spec = pl.BlockSpec((tile_n, 1), lambda i: (i, 0))
    out_shape = jax.ShapeDtypeStruct((n, 1), jnp.float32)

    needs_targets = not has_teacher or use_ce
    if needs_targets:
        tgt2d = targets.astype(jnp.int32).reshape(n, 1)

    # Dispatch / specialization on (teacher, kd_term, temp).
    if not has_teacher:
        kernel = _ce_kernel
        in_specs = [row_spec, col_spec]
        args = (output_logits, tgt2d)
        flops, transc = 5 * n * c, n * c
    elif not use_ce:  # kd_term == 1.0 -> KD-only (CE branch dropped)
        kernel = functools.partial(_kd_only_kernel, inv_temp=inv_temp,
                                   temp_sq=temp * temp)
        in_specs = [row_spec, row_spec]
        args = (output_logits, teacher_logits)
        flops, transc = 9 * n * c, 2 * n * c
    else:
        kernel = functools.partial(_kd_blend_kernel, kd_term=kd_term,
                                   inv_temp=inv_temp, temp_sq=temp * temp)
        in_specs = [row_spec, row_spec, col_spec]
        args = (output_logits, teacher_logits, tgt2d)
        n_exp = 2 if temp == 1.0 else 3
        flops, transc = 14 * n * c, n_exp * n * c

    in_bytes = sum(sz * n * c for sz in in_itemsizes)
    if needs_targets:
        in_bytes += n * 4
    cost = pl.CostEstimate(flops=flops, transcendentals=transc,
                           bytes_accessed=in_bytes + n * 4)

    cparams = pltpu.CompilerParams(
        dimension_semantics=("parallel",),
        vmem_limit_bytes=int(vmem_limit),
    )

    out = pl.pallas_call(
        kernel,
        out_shape=out_shape,
        grid_spec=pltpu.PrefetchScalarGridSpec(
            num_scalar_prefetch=0, grid=grid,
            in_specs=in_specs, out_specs=out_spec),
        compiler_params=cparams,
        cost_estimate=cost,
    )(*args)

    return out.reshape(n)


# ----------------------------------------------------------------------------
# Pure-JAX reference for validation
# ----------------------------------------------------------------------------
def _reference(output_logits, targets, teacher_logits, kd_term, temp):
    output_logits = output_logits.astype(jnp.float32)
    logq_full = jax.nn.log_softmax(output_logits, axis=1)
    ce = -jnp.take_along_axis(
        logq_full, targets[:, None].astype(jnp.int32), axis=1)[:, 0]
    if teacher_logits is None:
        return ce
    teacher_logits = teacher_logits.astype(jnp.float32)
    log_q = jax.nn.log_softmax(output_logits / temp, axis=1)
    p = jax.nn.softmax(teacher_logits / temp, axis=1)
    kl = jnp.where(p > 0, p * (jnp.log(p) - log_q), 0.0)
    kd = jnp.sum(kl, axis=1)
    return kd * kd_term * temp * temp + ce * (1.0 - kd_term)


if __name__ == "__main__":
    key = jax.random.PRNGKey(0)
    k1, k2, k3 = jax.random.split(key, 3)

    N, C = 16, 40  # batch, num classes (C deliberately not a multiple of 128)
    student = jax.random.normal(k1, (N, C), dtype=jnp.float32)
    teacher = jax.random.normal(k2, (N, C), dtype=jnp.float32)
    targets = jax.random.randint(k3, (N,), 0, C, dtype=jnp.int32)

    def check(out, ref, name):
        out = jax.block_until_ready(out)
        assert out.shape == ref.shape, (name, out.shape, ref.shape)
        assert jnp.allclose(out, ref, atol=1e-5, rtol=1e-5), (name, out, ref)

    # 1) CE only (teacher_logits=None)
    check(kd_loss(student, targets, None, kd_term=0.5, temp=2.0),
          _reference(student, targets, None, 0.5, 2.0), "ce")

    # 2) KD + CE blend, T != 1
    check(kd_loss(student, targets, teacher, kd_term=0.5, temp=2.0),
          _reference(student, targets, teacher, 0.5, 2.0), "kd_blend_T2")

    # 3) KD + CE blend, T == 1 (shared-exp specialization)
    check(kd_loss(student, targets, teacher, kd_term=0.3, temp=1.0),
          _reference(student, targets, teacher, 0.3, 1.0), "kd_blend_T1")

    # 4) KD only (kd_term == 1.0 specialization)
    check(kd_loss(student, targets, teacher, kd_term=1.0, temp=2.0),
          _reference(student, targets, teacher, 1.0, 2.0), "kd_only")

    # 5) kd_term == 0.0 with a teacher -> dispatches to the pure-CE kernel
    check(kd_loss(student, targets, teacher, kd_term=0.0, temp=2.0),
          _reference(student, targets, teacher, 0.0, 2.0), "kd0_ce")

    # 6) explicit small tile -> multi-step grid (pipelined, parallel)
    check(kd_loss(student, targets, teacher, kd_term=0.5, temp=2.0, tile_n=8),
          _reference(student, targets, teacher, 0.5, 2.0), "kd_tiled")

    # 7) masked teacher logits (-inf class) stay finite, like F.kl_div
    teacher_masked = teacher.at[:, 3].set(-jnp.inf)
    out_m = jax.block_until_ready(
        kd_loss(student, targets, teacher_masked, kd_term=0.7, temp=1.5))
    ref_m = _reference(student, targets, teacher_masked, 0.7, 1.5)
    assert bool(jnp.all(jnp.isfinite(out_m)))
    assert jnp.allclose(out_m, ref_m, atol=1e-5, rtol=1e-5), (out_m, ref_m)

    # 8) bf16 logits in HBM (cast to f32 inside the kernel)
    s_bf16 = student.astype(jnp.bfloat16)
    t_bf16 = teacher.astype(jnp.bfloat16)
    check(kd_loss(s_bf16, targets, t_bf16, kd_term=0.5, temp=2.0),
          _reference(s_bf16, targets, t_bf16, 0.5, 2.0), "bf16")

    print("KERNEL_OK")
</pallas_src>

<mosaic_0001>
module attributes {stable_mosaic.version = 11 : i64} {
  func.func @_ce_kernel(%arg0: i32, %arg1: memref<8x40xf32, #tpu.memory_space<vmem>>, %arg2: memref<8x1xi32, #tpu.memory_space<vmem>>, %arg3: memref<8x1xf32, #tpu.memory_space<vmem>>) attributes {dimension_semantics = [#tpu.dimension_semantics<parallel>], iteration_bounds = array<i64: 2>, scalar_prefetch = 0 : i64, scratch_operands = 0 : i64, tpu.core_type = #tpu.core_type<tc>, window_params = [{transform_indices = @transform_0, window_bounds = array<i64: 8, 40>}, {transform_indices = @transform_1, window_bounds = array<i64: 8, 1>}, {transform_indices = @transform_2, window_bounds = array<i64: 8, 1>}]} {
    %c0 = arith.constant 0 : index
    %c0_0 = arith.constant 0 : index
    %0 = vector.load %arg1[%c0, %c0_0] : memref<8x40xf32, #tpu.memory_space<vmem>>, vector<8x40xf32>
    %cst = arith.constant dense<0xFF800000> : vector<8xf32>
    %1 = vector.multi_reduction <maximumf>, %0, %cst [1] : vector<8x40xf32> to vector<8xf32>
    %2 = vector.shape_cast %1 : vector<8xf32> to vector<8x1xf32>
    %3 = vector.broadcast %2 : vector<8x1xf32> to vector<8x40xf32>
    %4 = arith.subf %0, %3 : vector<8x40xf32>
    %c0_1 = arith.constant 0 : index
    %c0_2 = arith.constant 0 : index
    %5 = vector.load %arg2[%c0_1, %c0_2] : memref<8x1xi32, #tpu.memory_space<vmem>>, vector<8x1xi32>
    %6 = math.exp %4 : vector<8x40xf32>
    %cst_3 = arith.constant dense<0.000000e+00> : vector<8xf32>
    %7 = vector.multi_reduction <add>, %6, %cst_3 [1] : vector<8x40xf32> to vector<8xf32>
    %8 = vector.shape_cast %7 : vector<8xf32> to vector<8x1xf32>
    %9 = math.log %8 : vector<8x1xf32>
    %10 = tpu.iota {dimensions = array<i32: 1>} : vector<8x40xi32>
    %11 = vector.broadcast %5 : vector<8x1xi32> to vector<8x40xi32>
    %12 = arith.cmpi eq, %10, %11 : vector<8x40xi32>
    %cst_4 = arith.constant 0.000000e+00 : f32
    %13 = vector.broadcast %cst_4 : f32 to vector<8x40xf32>
    %14 = arith.select %12, %4, %13 : vector<8x40xi1>, vector<8x40xf32>
    %cst_5 = arith.constant dense<0.000000e+00> : vector<8xf32>
    %15 = vector.multi_reduction <add>, %14, %cst_5 [1] : vector<8x40xf32> to vector<8xf32>
    %16 = vector.shape_cast %15 : vector<8xf32> to vector<8x1xf32>
    %17 = arith.subf %9, %16 : vector<8x1xf32>
    %c0_6 = arith.constant 0 : index
    %c0_7 = arith.constant 0 : index
    %18 = vector.load %arg3[%c0_6, %c0_7] : memref<8x1xf32, #tpu.memory_space<vmem>>, vector<8x1xf32>
    tpu.vector_store %arg3[%c0_6, %c0_7], %17 {strides = array<i32>} : memref<8x1xf32, #tpu.memory_space<vmem>>, vector<8x1xf32>,
    return
  }
  func.func @transform_0(%arg0: i32) -> (i32, i32) {
    %c0_i32 = arith.constant 0 : i32
    %c0_i32_0 = arith.constant 0 : i32
    return %arg0, %c0_i32 : i32, i32
  }
  func.func @transform_1(%arg0: i32) -> (i32, i32) {
    %c0_i32 = arith.constant 0 : i32
    %c0_i32_0 = arith.constant 0 : i32
    return %arg0, %c0_i32 : i32, i32
  }
  func.func @transform_2(%arg0: i32) -> (i32, i32) {
    %c0_i32 = arith.constant 0 : i32
    %c0_i32_0 = arith.constant 0 : i32
    return %arg0, %c0_i32 : i32, i32
  }
}

</mosaic_0001>

<llo_original>
// kernel: tpu_custom_call.1
$region0: #{tpu_custom_call.1}
  #allocation0 [shape = 'u32[]', space=smem, size = 0x4, offset = 0x4, fixed_abs, tag = 'smem constant byte address 0x4 - core index']
  #allocation1 [shape = 'u32[72,128]{1,0:T(1,128)}', space=vmem, size = 0x9000, scoped, tag = 'internal scratch']
  %s0 = inlined_call_operand.vmem [shape: f32[16,40], index: 0, kind: input, shape index: {}]
  %s1 = inlined_call_operand.vmem [shape: s32[16,1], index: 1, kind: input, shape index: {}]
  %s2 = inlined_call_operand.vmem [shape: f32[16,1], index: 2, kind: output, shape index: {}]
  %s3 = sld [smem:[#allocation0]]
  $region41: #{tpu_custom_call.1} parent=0
    _
  %s5 = ssub.s32 1, %s3
  %s6 = scalar_select 0, %s5, %s3
  loop: start=0, step=1, limit=4
  $region2: #{tpu_custom_call.1} parent=0 // loop_pre_header
    _
  $region3: #{tpu_custom_call.1} parent=0 // loop_header
    %s8 = sphi 0, %s12
    %p9 = scmp.ge.s32.totalorder %s8, 4
    %s18 = sphi 0, %s20
    %s21 = sphi 0, %s18
    %s22 = sphi 0, %s21
    %s38 = sphi 0, %s22
    %s44 = sphi 0, %s46
    %s47 = sphi 0, %s44
    %s48 = sphi 0, %s47
    %s64 = sphi 0, %s48
    %s70 = sphi 0, %s72
    %s73 = sphi 0, %s70
    %s74 = sphi 0, %s73
    %s90 = sphi 0, %s74
  $region4: #{tpu_custom_call.1} parent=0 // loop_header_branch
    %11 = sbr.rel (%p9) target = $region8
  $region5: #{tpu_custom_call.1} parent=0 // loop_body
    %s13 = ssub.s32 %s8, 1
    %s14 = ssub.s32 %s8, 2
    %s15 = sadd.s32 %s8, 1
    %s16 = ssub.s32 %s8, %s15
    %p17 = scmp.eq.s32.totalorder %s16, 0
    %s19 = sadd.s32 %s18, 1
    %s20 = scalar_select %p17, %s18, %s19
    %p23 = pneg %p17
    %p24 = scmp.eq.s32.totalorder %s8, 1
    %p25 = por %p23, %p24
    %p26 = scmp.ne.s32.totalorder %s18, %s21
    %p27 = scmp.eq.s32.totalorder %s8, 0
    %p28 = por %p26, %p27
    %p29 = scmp.ne.s32.totalorder %s18, %s21
    %p30 = scmp.eq.s32.totalorder %s13, 1
    %p31 = por %p29, %p30
    %p32 = scmp.ne.s32.totalorder %s21, %s22
    %p33 = scmp.eq.s32.totalorder %s13, 0
    %p34 = por %p32, %p33
    %p35 = scmp.ne.s32.totalorder %s21, %s22
    %p36 = scmp.eq.s32.totalorder %s14, 1
    %p37 = por %p35, %p36
    %p39 = scmp.ne.s32.totalorder %s22, %s38
    %p40 = scmp.eq.s32.totalorder %s14, 0
    %p41 = por %p39, %p40
    %s42 = ssub.s32 %s8, %s15
    %p43 = scmp.eq.s32.totalorder %s42, 0
    %s45 = sadd.s32 %s44, 1
    %s46 = scalar_select %p43, %s44, %s45
    %p49 = pneg %p43
    %p50 = scmp.eq.s32.totalorder %s8, 1
    %p51 = por %p49, %p50
    %p52 = scmp.ne.s32.totalorder %s44, %s47
    %p53 = scmp.eq.s32.totalorder %s8, 0
    %p54 = por %p52, %p53
    %p55 = scmp.ne.s32.totalorder %s44, %s47
    %p56 = scmp.eq.s32.totalorder %s13, 1
    %p57 = por %p55, %p56
    %p58 = scmp.ne.s32.totalorder %s47, %s48
    %p59 = scmp.eq.s32.totalorder %s13, 0
    %p60 = por %p58, %p59
    %p61 = scmp.ne.s32.totalorder %s47, %s48
    %p62 = scmp.eq.s32.totalorder %s14, 1
    %p63 = por %p61, %p62
    %p65 = scmp.ne.s32.totalorder %s48, %s64
    %p66 = scmp.eq.s32.totalorder %s14, 0
    %p67 = por %p65, %p66
    %s68 = ssub.s32 %s8, %s15
    %p69 = scmp.eq.s32.totalorder %s68, 0
    %s71 = sadd.s32 %s70, 1
    %s72 = scalar_select %p69, %s70, %s71
    %p75 = pneg %p69
    %p76 = scmp.eq.s32.totalorder %s8, 1
    %p77 = por %p75, %p76
    %p78 = scmp.ne.s32.totalorder %s70, %s73
    %p79 = scmp.eq.s32.totalorder %s8, 0
    %p80 = por %p78, %p79
    %p81 = scmp.ne.s32.totalorder %s70, %s73
    %p82 = scmp.eq.s32.totalorder %s13, 1
    %p83 = por %p81, %p82
    %p84 = scmp.ne.s32.totalorder %s73, %s74
    %p85 = scmp.eq.s32.totalorder %s13, 0
    %p86 = por %p84, %p85
    %p87 = scmp.ne.s32.totalorder %s73, %s74
    %p88 = scmp.eq.s32.totalorder %s14, 1
    %p89 = por %p87, %p88
    %p91 = scmp.ne.s32.totalorder %s74, %s90
    %p92 = scmp.eq.s32.totalorder %s14, 0
    %p93 = por %p91, %p92
    %p94 = scmp.le.s32.totalorder 1, %s8
    %p95 = scmp.lt.s32.totalorder %s8, 3
    %p96 = pnand %p94, %p95
    %p97 = pneg %p96
    // Predicated region
    $region9: #{tpu_custom_call.1} parent=5 // pred_check
      _
    $region10: #{tpu_custom_call.1} parent=5 // pred_check_branch
      %99 = sbr.rel (%p96) target = $region12
    $region11: #{tpu_custom_call.1} parent=5 // pred_region
      %s100 = ssub.s32 %s8, 1
    $region12: #{tpu_custom_call.1} parent=5 // pred_fallthru
      _
    %p101 = scmp.lt.s32.totalorder %s8, 2
    // Predicated region
    $region13: #{tpu_custom_call.1} parent=5 // pred_check
      %p102 = pneg %p101
    $region14: #{tpu_custom_call.1} parent=5 // pred_check_branch
      %104 = sbr.rel (%p102) target = $region16
    $region15: #{tpu_custom_call.1} parent=5 // pred_region
      // Predicated region
      $region17: #{tpu_custom_call.1} parent=15 // pred_check
        %p105 = pneg %p28
      $region18: #{tpu_custom_call.1} parent=15 // pred_check_branch
        %107 = sbr.rel (%p105) target = $region20
      $region19: #{tpu_custom_call.1} parent=15 // pred_region
        %p108 = scmp.lt.s32.totalorder %s8, 1
        %s109 = scalar_select %p108, %s8, 1
        %s110 = smul.addr %s109, 8
        %s111 = scalar_lea.vmem %s0, %s110
      $region20: #{tpu_custom_call.1} parent=15 // pred_fallthru
        _
      // Predicated region
      $region21: #{tpu_custom_call.1} parent=15 // pred_check
        %p112 = pneg %p54
      $region22: #{tpu_custom_call.1} parent=15 // pred_check_branch
        %114 = sbr.rel (%p112) target = $region24
      $region23: #{tpu_custom_call.1} parent=15 // pred_region
        %p115 = scmp.lt.s32.totalorder %s8, 1
        %s116 = scalar_select %p115, %s8, 1
        %s117 = smul.addr %s116, 8
        %s118 = scalar_lea.vmem %s1, %s117
      $region24: #{tpu_custom_call.1} parent=15 // pred_fallthru
        _
    $region16: #{tpu_custom_call.1} parent=5 // pred_fallthru
      _
    %p119 = scmp.le.s32.totalorder 1, %s8
    %p120 = scmp.lt.s32.totalorder %s8, 3
    %p121 = pnand %p119, %p120
    %p122 = pneg %p121
    // Predicated region
    $region25: #{tpu_custom_call.1} parent=5 // pred_check
      _
    $region26: #{tpu_custom_call.1} parent=5 // pred_check_branch
      %124 = sbr.rel (%p121) target = $region28
    $region27: #{tpu_custom_call.1} parent=5 // pred_region
      %s125 = ssub.s32 %s8, 1
      %p126 = scmp.lt.s32.totalorder %s13, 1
      %s127 = scalar_select %p126, %s13, 1
      %s128 = smul.addr %s127, 8
      %s129 = scalar_lea.vmem %s0, %s128
      %p130 = pneg %p34
      %p131 = pneg %p31
      %p132 = scmp.lt.s32.totalorder %s13, 1
      %s133 = scalar_select %p132, %s13, 1
      %s134 = smul.addr %s133, 8
      %s135 = scalar_lea.vmem %s1, %s134
      %p136 = pneg %p60
      %p137 = pneg %p57
      %p138 = pneg %p86
      %p139 = pneg %p83
      %p140 = scmp.lt.s32.totalorder %s13, 1
      %s141 = scalar_select %p140, %s13, 1
      %s142 = smul.addr %s141, 8
      %s143 = scalar_lea.vmem %s2, %s142
      %p144 = scmp.lt.s32.totalorder %s13, 1
      %s145 = scalar_select %p144, %s13, 1
      %s146 = smul.addr %s145, 8
      %s147 = scalar_lea.vmem %s0, %s146
      %p148 = scmp.lt.s32.totalorder %s13, 1
      %s149 = scalar_select %p148, %s13, 1
      %s150 = smul.addr %s149, 8
      %s151 = scalar_lea.vmem %s1, %s150
      %p152 = scmp.lt.s32.totalorder %s13, 1
      %s153 = scalar_select %p152, %s13, 1
      %s154 = smul.addr %s153, 8
      %s155 = scalar_lea.vmem %s2, %s154
      %v156 = vld [vmem:[%s147] sm:$0xff]
      %vm157 = vcmask 326656
      %v158 = vsel %vm157, %v156, -inf
      %159 = vmax.xlane.f32.xlu0 %v158
      %v160 = vpop.xlane.xlu0 %159
      %v161 = vsub.f32 %v156, %v160
      %v162 = vld [vmem:[%s151] sm:$0xff]
      %v163 = vmul.f32 %v161, 1.442695
      %v164 = vpow.pop %v163
      %v165 = vsel %vm157, %v164, 0.0
      %166 = vadd.xlane.f32.xlu0 %v165
      %v167 = vpop.xlane.xlu0 %166
      %v168 = vlog2.pop %v167
      %v169 = vmul.f32 %v168, 0.6931472
      %v170 = vlaneseq
      %v171 = vand.u32 %v170, 127
      %172 = vset.pattern.permute.xlu0 0
      %173 = vperm.xlu0 %172, %v162
      %v174 = vpop.permute.xlu0 %173
      %vm175 = vcmp.eq.s32.totalorder %v171, %v174
      %v176 = vsel %vm175, %v161, 0.0
      %v177 = vsel %vm157, %v176, 0.0
      %178 = vadd.xlane.f32.xlu0 %v177
      %v179 = vpop.xlane.xlu0 %178
      %v180 = vsub.f32 %v169, %v179
      %vm181 = vcmask 7168
      %182 = vst.msk [vmem:[%s155] sm:$0xff] %vm181, %v180
      %p183 = scmp.lt.s32.totalorder %s13, 1
      %s184 = scalar_select %p183, %s13, 1
      %s185 = smul.addr %s184, 8
      %s186 = scalar_lea.vmem %s2, %s185
      // Predicated region
      $region29: #{tpu_custom_call.1} parent=27 // pred_check
        %p187 = pneg %p83
      $region30: #{tpu_custom_call.1} parent=27 // pred_check_branch
        %189 = sbr.rel (%p187) target = $region32
      $region31: #{tpu_custom_call.1} parent=27 // pred_region
        _
      $region32: #{tpu_custom_call.1} parent=27 // pred_fallthru
        _
    $region28: #{tpu_custom_call.1} parent=5 // pred_fallthru
      _
    %p190 = scmp.le.s32.totalorder 2, %s8
    // Predicated region
    $region33: #{tpu_custom_call.1} parent=5 // pred_check
      %p191 = pneg %p190
    $region34: #{tpu_custom_call.1} parent=5 // pred_check_branch
      %193 = sbr.rel (%p191) target = $region36
    $region35: #{tpu_custom_call.1} parent=5 // pred_region
      %s194 = ssub.s32 %s8, 2
      // Predicated region
      $region37: #{tpu_custom_call.1} parent=35 // pred_check
        %p195 = pneg %p89
      $region38: #{tpu_custom_call.1} parent=35 // pred_check_branch
        %197 = sbr.rel (%p195) target = $region40
      $region39: #{tpu_custom_call.1} parent=35 // pred_region
        %p198 = scmp.lt.s32.totalorder %s14, 1
        %s199 = scalar_select %p198, %s14, 1
        %s200 = smul.addr %s199, 8
        %s201 = scalar_lea.vmem %s2, %s200
      $region40: #{tpu_custom_call.1} parent=35 // pred_fallthru
        _
    $region36: #{tpu_custom_call.1} parent=5 // pred_fallthru
      _
  $region6: #{tpu_custom_call.1} parent=0 // loop_footer
    %s12 = sadd.s32 1, %s8
  $region7: #{tpu_custom_call.1} parent=0 // loop_footer_branch
    %7 = sbr.rel target = $region3
  $region8: #{tpu_custom_call.1} parent=0 // loop_exit
    _

</llo_original>
